<compile_context>
chip_gen: v6e
topology: v6e:2x2x1
jax: 0.10.0
libtpu: 0.0.40
codegen_flags: <defaults>
</compile_context>

<pallas_src>
import functools

import numpy as np
import jax
import jax.numpy as jnp
from jax import lax
from jax.experimental import pallas as pl
from jax.experimental.pallas import tpu as pltpu


# --------------------------------------------------------------- tiling / vmem helpers

@functools.lru_cache(maxsize=None)
def _vmem_limit_bytes():
    """Generation-aware scoped-VMEM request (≈3/4 of per-core VMEM, capped)."""
    try:
        info = pltpu.get_tpu_info()
        cap = int(getattr(info, "vmem_capacity_bytes", 0) or 0)
        if cap > 0:
            return int(min(cap - cap // 4, 100 * 1024 * 1024))
    except Exception:
        pass
    return 48 * 1024 * 1024  # safe on v5e/v6e (128 MiB) and v7x (64 MiB/TC)


def _cparams(dims):
    return pltpu.CompilerParams(dimension_semantics=dims,
                                vmem_limit_bytes=_vmem_limit_bytes())


def _tile_m(M, target=256):
    """Sublane (second-to-last) tile: full dim if small, else `target` (mult. of 8);
    ragged final blocks are handled by pl.cdiv + masked writeback."""
    return M if M <= target else target


def _tile_lane(N, target=512):
    """Lane (last) tile: must be a multiple of 128 or the full dim."""
    if N <= target or N % 128 != 0:
        return N
    return target


def _tile_div(dim, target, granule):
    """Largest multiple-of-`granule` divisor of `dim` that is <= target (else full dim).
    Used where padding would corrupt an accumulation (K tiles, Sk tiles)."""
    if dim <= target:
        return dim
    t = (target // granule) * granule
    while t >= granule:
        if dim % t == 0:
            return t
        t -= granule
    return dim


def _tile_k(K, target=1024):
    return _tile_div(K, target, 128)     # K is a lane dim of the x block


# --------------------------------------------------------------------- linear kernels

def _linear_kernel(x_ref, w_ref, b_ref, o_ref, acc_ref, *, act):
    @pl.when(pl.program_id(2) == 0)
    def _init():
        acc_ref[...] = jnp.zeros_like(acc_ref)

    acc_ref[...] += jnp.dot(x_ref[...].astype(jnp.bfloat16),
                            w_ref[...].astype(jnp.bfloat16),
                            preferred_element_type=jnp.float32)

    @pl.when(pl.program_id(2) == pl.num_programs(2) - 1)
    def _fin():
        y = acc_ref[...] + b_ref[...]
        if act == "relu":
            y = jnp.maximum(y, 0.0)
        o_ref[...] = y.astype(o_ref.dtype)


def linear(x2d, w, b, act="none", out_dtype=jnp.float32):
    """x2d: [M, K] @ w: [K, N] + b  (optional fused ReLU).  bf16 MXU, f32 accumulate.
    Grid = (N_tiles, M_tiles, K_tiles) with K fastest; when K fits in one tile the
    weight block index is invariant along the fast M axis -> each weight tile DMA'd once."""
    M, K = x2d.shape
    N = w.shape[1]
    tm, tn, tk = _tile_m(M), _tile_lane(N), _tile_k(K)
    grid = (pl.cdiv(N, tn), pl.cdiv(M, tm), pl.cdiv(K, tk))
    w_reads = 1 if grid[2] == 1 else grid[1]
    cost = pl.CostEstimate(
        flops=2 * M * K * N, transcendentals=0,
        bytes_accessed=int(x2d.dtype.itemsize * M * K * grid[0]
                           + w.dtype.itemsize * K * N * w_reads
                           + jnp.dtype(out_dtype).itemsize * M * N + 4 * N))
    return pl.pallas_call(
        functools.partial(_linear_kernel, act=act),
        out_shape=jax.ShapeDtypeStruct((M, N), out_dtype),
        grid=grid,
        in_specs=[
            pl.BlockSpec((tm, tk), lambda j, i, k: (i, k)),
            pl.BlockSpec((tk, tn), lambda j, i, k: (k, j)),
            pl.BlockSpec((1, tn), lambda j, i, k: (0, j)),
        ],
        out_specs=pl.BlockSpec((tm, tn), lambda j, i, k: (i, j)),
        scratch_shapes=[pltpu.VMEM((tm, tn), jnp.float32)],
        compiler_params=_cparams(("parallel", "parallel", "arbitrary")),
        cost_estimate=cost,
    )(x2d, w, b.reshape(1, N))


def _linear_res_ln_kernel(x_ref, w_ref, b_ref, r_ref, g_ref, bb_ref, o_ref, acc_ref, *, eps):
    @pl.when(pl.program_id(1) == 0)
    def _init():
        acc_ref[...] = jnp.zeros_like(acc_ref)

    acc_ref[...] += jnp.dot(x_ref[...].astype(jnp.bfloat16),
                            w_ref[...].astype(jnp.bfloat16),
                            preferred_element_type=jnp.float32)

    @pl.when(pl.program_id(1) == pl.num_programs(1) - 1)
    def _fin():
        y = acc_ref[...] + b_ref[...] + r_ref[...]
        mu = jnp.mean(y, axis=-1, keepdims=True)
        var = jnp.mean(jnp.square(y - mu), axis=-1, keepdims=True)
        o_ref[...] = ((y - mu) * lax.rsqrt(var + eps) * g_ref[...] + bb_ref[...]
                      ).astype(o_ref.dtype)


def linear_residual_layernorm(x2d, w, b, res2d, gamma, beta, eps=1e-6):
    """LayerNorm(x2d @ w + b + res2d) fused in one kernel.  N is kept whole (LN reduces
    over it); K is tiled with an f32 accumulator so huge (K, N) weights never need to
    fit VMEM as one block."""
    M, K = x2d.shape
    N = w.shape[1]
    tm, tk = _tile_m(M), _tile_k(K)
    grid = (pl.cdiv(M, tm), pl.cdiv(K, tk))
    cost = pl.CostEstimate(
        flops=2 * M * K * N + 8 * M * N, transcendentals=M,
        bytes_accessed=int(x2d.dtype.itemsize * M * K
                           + w.dtype.itemsize * K * N * (grid[0] if grid[1] > 1 else 1)
                           + 4 * (2 * M * N + 3 * N)))
    return pl.pallas_call(
        functools.partial(_linear_res_ln_kernel, eps=eps),
        out_shape=jax.ShapeDtypeStruct((M, N), jnp.float32),
        grid=grid,
        in_specs=[
            pl.BlockSpec((tm, tk), lambda i, k: (i, k)),
            pl.BlockSpec((tk, N), lambda i, k: (k, 0)),
            pl.BlockSpec((1, N), lambda i, k: (0, 0)),
            pl.BlockSpec((tm, N), lambda i, k: (i, 0)),
            pl.BlockSpec((1, N), lambda i, k: (0, 0)),
            pl.BlockSpec((1, N), lambda i, k: (0, 0)),
        ],
        out_specs=pl.BlockSpec((tm, N), lambda i, k: (i, 0)),
        scratch_shapes=[pltpu.VMEM((tm, N), jnp.float32)],
        compiler_params=_cparams(("parallel", "arbitrary")),
        cost_estimate=cost,
    )(x2d, w, b.reshape(1, N), res2d, gamma.reshape(1, N), beta.reshape(1, N))


def _layernorm_kernel(x_ref, g_ref, b_ref, o_ref, *, eps):
    x = x_ref[...]
    mu = jnp.mean(x, axis=-1, keepdims=True)
    var = jnp.mean(jnp.square(x - mu), axis=-1, keepdims=True)
    o_ref[...] = (x - mu) * lax.rsqrt(var + eps) * g_ref[...] + b_ref[...]


def layer_norm(x, gamma, beta, eps=1e-6):
    """Top-level LayerNorm over the last dim."""
    shape = x.shape
    D = shape[-1]
    x2d = x.reshape(-1, D)
    M = x2d.shape[0]
    tm = _tile_m(M)
    y = pl.pallas_call(
        functools.partial(_layernorm_kernel, eps=eps),
        out_shape=jax.ShapeDtypeStruct((M, D), jnp.float32),
        grid=(pl.cdiv(M, tm),),
        in_specs=[
            pl.BlockSpec((tm, D), lambda i: (i, 0)),
            pl.BlockSpec((1, D), lambda i: (0, 0)),
            pl.BlockSpec((1, D), lambda i: (0, 0)),
        ],
        out_specs=pl.BlockSpec((tm, D), lambda i: (i, 0)),
        compiler_params=_cparams(("parallel",)),
    )(x2d, gamma.reshape(1, D), beta.reshape(1, D))
    return y.reshape(shape)


# ----------------------------------------------- fused multi-output projection kernel

def _proj_kernel(*refs, n_out):
    x_ref = refs[0]
    w_refs = refs[1:1 + n_out]
    b_refs = refs[1 + n_out:1 + 2 * n_out]
    o_refs = refs[1 + 2 * n_out:]
    xb = x_ref[...].astype(jnp.bfloat16)            # x streamed once for all projections
    for w_ref, b_ref, o_ref in zip(w_refs, b_refs, o_refs):
        y = jnp.dot(xb, w_ref[...].astype(jnp.bfloat16),
                    preferred_element_type=jnp.float32) + b_ref[...]
        o_ref[...] = y.astype(o_ref.dtype)


def fused_projections(x2d, weights, biases, out_dtype=jnp.bfloat16):
    """One pallas_call computing x2d @ w_i + b_i for every i, writing SEPARATE outputs
    (no fused-buffer column slicing in HBM afterwards)."""
    M, K = x2d.shape
    n_out = len(weights)
    tm = _tile_m(M)
    in_specs = [pl.BlockSpec((tm, K), lambda i: (i, 0))]
    for w in weights:
        in_specs.append(pl.BlockSpec((K, w.shape[1]), lambda i: (0, 0)))
    for w in weights:
        in_specs.append(pl.BlockSpec((1, w.shape[1]), lambda i: (0, 0)))
    out_specs = tuple(pl.BlockSpec((tm, w.shape[1]), lambda i: (i, 0)) for w in weights)
    out_shape = tuple(jax.ShapeDtypeStruct((M, w.shape[1]), out_dtype) for w in weights)
    n_sum = sum(int(w.shape[1]) for w in weights)
    cost = pl.CostEstimate(
        flops=2 * M * K * n_sum, transcendentals=0,
        bytes_accessed=int(x2d.dtype.itemsize * M * K + 2 * K * n_sum
                           + 4 * n_sum + jnp.dtype(out_dtype).itemsize * M * n_sum))
    outs = pl.pallas_call(
        functools.partial(_proj_kernel, n_out=n_out),
        out_shape=out_shape,
        grid=(pl.cdiv(M, tm),),
        in_specs=in_specs,
        out_specs=out_specs,
        compiler_params=_cparams(("parallel",)),
        cost_estimate=cost,
    )(x2d, *weights, *(b.reshape(1, -1) for b in biases))
    return outs


# --------------------------------------------------------- flash attention (head-folded)

def _mha_kernel(q_ref, k_ref, v_ref, m_ref, o_ref, m_sc, l_sc, acc_sc,
                *, n_head, d_k, d_v):
    ki = pl.program_id(2)

    @pl.when(ki == 0)
    def _init():
        m_sc[...] = jnp.full(m_sc.shape, -jnp.inf, dtype=m_sc.dtype)
        l_sc[...] = jnp.zeros_like(l_sc)
        acc_sc[...] = jnp.zeros_like(acc_sc)

    mask = m_ref[...]                                      # [tq,tk] or [1,tk], additive
    for h in range(n_head):                                # head split is free in VMEM
        q_h = q_ref[:, h * d_k:(h + 1) * d_k]              # [tq, d_k] bf16 (scale pre-folded)
        k_h = k_ref[:, h * d_k:(h + 1) * d_k]              # [tk, d_k] bf16
        v_h = v_ref[:, h * d_v:(h + 1) * d_v]              # [tk, d_v] bf16
        s = lax.dot_general(q_h, k_h, (((1,), (1,)), ((), ())),
                            preferred_element_type=jnp.float32)     # [tq, tk]
        s = s + mask
        m_prev = m_sc[:, h:h + 1]
        m_new = jnp.maximum(m_prev, jnp.max(s, axis=-1, keepdims=True))
        alpha = jnp.exp(m_prev - m_new)
        p = jnp.exp(s - m_new)
        l_sc[:, h:h + 1] = alpha * l_sc[:, h:h + 1] + jnp.sum(p, axis=-1, keepdims=True)
        acc_sc[:, h * d_v:(h + 1) * d_v] = (
            alpha * acc_sc[:, h * d_v:(h + 1) * d_v]
            + jnp.dot(p.astype(jnp.bfloat16), v_h, preferred_element_type=jnp.float32))
        m_sc[:, h:h + 1] = m_new

    @pl.when(ki == pl.num_programs(2) - 1)
    def _fin():
        inv = 1.0 / l_sc[...]                              # exact reciprocal (parity)
        acc = acc_sc[...]
        for h in range(n_head):
            o_ref[:, h * d_v:(h + 1) * d_v] = (
                acc[:, h * d_v:(h + 1) * d_v] * inv[:, h:h + 1]).astype(o_ref.dtype)


def mha_attention(q, k, v, mask_add, n_head, d_k, d_v):
    """q:[B,Sq,H*dk] k:[B,Sk,H*dk] v:[B,Sk,H*dv] (bf16), mask_add:[B,Mq,Sk] f32 (0/-1e9)
    -> [B,Sq,H*dv] f32.  Grid (B, Sq-tiles, Sk-tiles) with online softmax over Sk."""
    B, Sq, _ = q.shape
    Sk = k.shape[1]
    Mq = mask_add.shape[1]
    tq = _tile_div(Sq, 256, 8)
    tk = _tile_div(Sk, 512, 128)
    nq, nk = Sq // tq, Sk // tk
    if Mq == 1:
        mask_spec = pl.BlockSpec((None, 1, tk), lambda b, qi, ki: (b, 0, ki))
    else:
        mask_spec = pl.BlockSpec((None, tq, tk), lambda b, qi, ki: (b, qi, ki))
    flops = 2 * B * n_head * Sq * Sk * (d_k + d_v)
    bytes_io = int(2 * B * Sq * n_head * d_k
                   + 2 * B * Sk * n_head * (d_k + d_v) * nq
                   + 4 * B * Mq * Sk * nq
                   + 4 * B * Sq * n_head * d_v)
    return pl.pallas_call(
        functools.partial(_mha_kernel, n_head=n_head, d_k=d_k, d_v=d_v),
        out_shape=jax.ShapeDtypeStruct((B, Sq, n_head * d_v), jnp.float32),
        grid=(B, nq, nk),
        in_specs=[
            pl.BlockSpec((None, tq, n_head * d_k), lambda b, qi, ki: (b, qi, 0)),
            pl.BlockSpec((None, tk, n_head * d_k), lambda b, qi, ki: (b, ki, 0)),
            pl.BlockSpec((None, tk, n_head * d_v), lambda b, qi, ki: (b, ki, 0)),
            mask_spec,
        ],
        out_specs=pl.BlockSpec((None, tq, n_head * d_v), lambda b, qi, ki: (b, qi, 0)),
        scratch_shapes=[pltpu.VMEM((tq, n_head), jnp.float32),          # running max
                        pltpu.VMEM((tq, n_head), jnp.float32),          # running sum
                        pltpu.VMEM((tq, n_head * d_v), jnp.float32)],   # accumulator
        compiler_params=_cparams(("parallel", "parallel", "arbitrary")),
        cost_estimate=pl.CostEstimate(flops=flops,
                                      transcendentals=B * n_head * Sq * Sk,
                                      bytes_accessed=bytes_io),
    )(q, k, v, mask_add)


# ------------------------------------------------------- model glue (plain JAX wiring)

def multi_head_attention(p, q_in, kv_in, mask_add, n_head, d_k, d_v, need_probs=False):
    B, Sq, D = q_in.shape
    Sk = kv_in.shape[1]
    res2d = q_in.reshape(B * Sq, D)
    if q_in is kv_in:
        # self-attention: one kernel streams x once through wq|wk|wv
        q2d, k2d, v2d = fused_projections(res2d, (p["wq"], p["wk"], p["wv"]),
                                          (p["bq"], p["bk"], p["bv"]))
    else:
        (q2d,) = fused_projections(res2d, (p["wq"],), (p["bq"],))
        kv2d = kv_in.reshape(B * Sk, D)
        k2d, v2d = fused_projections(kv2d, (p["wk"], p["wv"]), (p["bk"], p["bv"]))
    # head-folded layouts; these reshapes only touch leading dims (no HBM copies)
    q = q2d.reshape(B, Sq, n_head * d_k)
    k = k2d.reshape(B, Sk, n_head * d_k)
    v = v2d.reshape(B, Sk, n_head * d_v)
    o = mha_attention(q, k, v, mask_add, n_head, d_k, d_v)          # [B,Sq,H*d_v] f32

    attn = None
    if need_probs:
        # inspection-only path (return_attns=True); scale already folded into wq
        qh = q.astype(jnp.float32).reshape(B, Sq, n_head, d_k).transpose(0, 2, 1, 3)
        kh = k.astype(jnp.float32).reshape(B, Sk, n_head, d_k).transpose(0, 2, 1, 3)
        s = jnp.einsum("bhqd,bhkd->bhqk", qh, kh) + mask_add[:, None]
        attn = jax.nn.softmax(s, axis=-1)

    # out-projection + residual add + LayerNorm fused in one kernel
    out = linear_residual_layernorm(o.reshape(B * Sq, n_head * d_v),
                                    p["wo"], p["bo"], res2d, p["ln_g"], p["ln_b"])
    return out.reshape(B, Sq, D), attn


def feed_forward(p, x):
    B, S, D = x.shape
    x2d = x.reshape(B * S, D)
    h = linear(x2d, p["w1"], p["b1"], act="relu", out_dtype=jnp.bfloat16)
    out = linear_residual_layernorm(h, p["w2"], p["b2"], x2d, p["ln_g"], p["ln_b"])
    return out.reshape(B, S, D)


def decoder_layer(p, dec_input, enc_output, slf_mask_add, cross_mask_add,
                  n_head, d_k, d_v, need_probs=False):
    x, slf_attn = multi_head_attention(p["slf_attn"], dec_input, dec_input,
                                       slf_mask_add, n_head, d_k, d_v, need_probs)
    x, _ = multi_head_attention(p["enc_attn"], x, enc_output,
                                cross_mask_add, n_head, d_k, d_v, False)
    x = feed_forward(p["pos_ffn"], x)
    return x, slf_attn


def sinusoid_position_table(n_position, d_hid):
    pos = np.arange(n_position, dtype=np.float64)[:, None]
    i = np.arange(d_hid, dtype=np.float64)
    angle = pos / np.power(10000.0, 2.0 * (i // 2) / d_hid)
    table = np.zeros((n_position, d_hid), dtype=np.float64)
    table[:, 0::2] = np.sin(angle[:, 0::2])
    table[:, 1::2] = np.cos(angle[:, 1::2])
    return jnp.asarray(table[None], dtype=jnp.float32)    # [1, n_position, d_hid]


def h_decoder_forward(params, trg_problem_seq, trg_skill_seq, trg_mask, pad_mask,
                      enc_output, target_qno, target_kno,
                      n_head, d_k, d_v, return_attns=False):
    del target_kno  # unused in the reference forward
    B, S = trg_problem_seq.shape
    x = (jnp.take(params["problem_emb"], trg_problem_seq, axis=0)
         + jnp.take(params["skill_emb"], trg_skill_seq, axis=0)
         + jnp.take(params["qno_emb"], target_qno, axis=0))
    x = x + params["pos_table"][:, :S]                    # positional encoding
    # nn.Dropout -> identity (eval mode)
    x = layer_norm(x, params["ln_g"], params["ln_b"])
    # additive masks (0 keep / -1e9 masked) built once and reused by every layer/head
    slf_mask_add = (1.0 - trg_mask.astype(jnp.float32)) * jnp.float32(-1e9)   # [B,S,S]
    cross_mask_add = (1.0 - pad_mask.astype(jnp.float32)) * jnp.float32(-1e9)  # [B,1,Sk]
    attns = []
    for lp in params["layers"]:
        x, a = decoder_layer(lp, x, enc_output, slf_mask_add, cross_mask_add,
                             n_head, d_k, d_v, need_probs=return_attns)
        if return_attns:
            attns.append(a)
    if return_attns:
        return x, attns
    return x


# -------------------------------------------------------------------------- param init

def init_params(key, embedding_size, n_layers, n_head, d_k, d_v, d_model, d_inner,
                n_type_problem, n_type_skill, n_type_qno, n_position):
    def nrm(k, shape, scale=0.02, dtype=jnp.float32):
        return (scale * jax.random.normal(k, shape)).astype(dtype)

    keys = jax.random.split(key, 4 + n_layers)
    params = {
        "problem_emb": nrm(keys[0], (n_type_problem, embedding_size)),
        "skill_emb":   nrm(keys[1], (n_type_skill, embedding_size)),
        "qno_emb":     nrm(keys[2], (n_type_qno, embedding_size)),
        "pos_table":   sinusoid_position_table(n_position, embedding_size),
        "ln_g": jnp.ones((d_model,), jnp.float32),
        "ln_b": jnp.zeros((d_model,), jnp.float32),
        "layers": [],
    }
    qk_scale = 1.0 / float(np.sqrt(d_k))

    def mha_params(k):
        ks = jax.random.split(k, 4)
        # 1/sqrt(d_k) folded into the Q projection (bias is zero, would be scaled too)
        wq = (nrm(ks[0], (d_model, n_head * d_k)) * qk_scale).astype(jnp.bfloat16)
        return {
            "wq": wq, "bq": jnp.zeros((n_head * d_k,), jnp.float32),
            "wk": nrm(ks[1], (d_model, n_head * d_k), dtype=jnp.bfloat16),
            "bk": jnp.zeros((n_head * d_k,), jnp.float32),
            "wv": nrm(ks[2], (d_model, n_head * d_v), dtype=jnp.bfloat16),
            "bv": jnp.zeros((n_head * d_v,), jnp.float32),
            "wo": nrm(ks[3], (n_head * d_v, d_model), dtype=jnp.bfloat16),
            "bo": jnp.zeros((d_model,), jnp.float32),
            "ln_g": jnp.ones((d_model,), jnp.float32),
            "ln_b": jnp.zeros((d_model,), jnp.float32),
        }

    for li in range(n_layers):
        ks = jax.random.split(keys[4 + li], 4)
        params["layers"].append({
            "slf_attn": mha_params(ks[0]),
            "enc_attn": mha_params(ks[1]),
            "pos_ffn": {
                "w1": nrm(ks[2], (d_model, d_inner), dtype=jnp.bfloat16),
                "b1": jnp.zeros((d_inner,), jnp.float32),
                "w2": nrm(ks[3], (d_inner, d_model), dtype=jnp.bfloat16),
                "b2": jnp.zeros((d_model,), jnp.float32),
                "ln_g": jnp.ones((d_model,), jnp.float32),
                "ln_b": jnp.zeros((d_model,), jnp.float32),
            },
        })
    return params


# ------------------------------------------------------------------------------- main

if __name__ == "__main__":
    # Small config consistent with the module signature.
    embedding_size = d_model = 32
    n_layers, n_head, d_k, d_v, d_inner = 2, 2, 16, 16, 64
    n_type_problem, n_type_skill, n_type_qno, n_type_kno = 50, 20, 30, 15
    n_position = 200
    B, S = 2, 8

    root = jax.random.PRNGKey(0)
    k_par, k_p, k_s, k_q, k_k, k_enc = jax.random.split(root, 6)

    params = init_params(k_par, embedding_size, n_layers, n_head, d_k, d_v, d_model,
                         d_inner, n_type_problem, n_type_skill, n_type_qno, n_position)

    trg_problem_seq = jax.random.randint(k_p, (B, S), 0, n_type_problem, dtype=jnp.int32)
    trg_skill_seq   = jax.random.randint(k_s, (B, S), 0, n_type_skill, dtype=jnp.int32)
    target_qno      = jax.random.randint(k_q, (B, S), 0, n_type_qno, dtype=jnp.int32)
    target_kno      = jax.random.randint(k_k, (B, S), 0, n_type_kno, dtype=jnp.int32)
    enc_output      = jax.random.normal(k_enc, (B, S, d_model), dtype=jnp.float32)

    # masks: 1 = attend, 0 = masked (pad second sequence after position 5)
    lens = jnp.array([S, 5], dtype=jnp.int32)
    pos = jnp.arange(S)
    pad_mask = (pos[None, :] < lens[:, None]).astype(jnp.int32)[:, None, :]     # [B,1,S]
    subsequent = jnp.tril(jnp.ones((S, S), jnp.int32))                           # [S,S]
    trg_mask = (pad_mask * subsequent[None]).astype(jnp.int32)                   # [B,S,S]

    out = h_decoder_forward(params, trg_problem_seq, trg_skill_seq, trg_mask,
                            pad_mask, enc_output, target_qno, target_kno,
                            n_head, d_k, d_v)
    out = jax.block_until_ready(out)
    assert out.shape == (B, S, d_model) and out.dtype == jnp.float32
    assert bool(jnp.all(jnp.isfinite(out)))
    print("KERNEL_OK")
</pallas_src>

<mosaic_0001>
module attributes {stable_mosaic.version = 11 : i64} {
  func.func @_layernorm_kernel(%arg0: i32, %arg1: memref<16x32xf32, #tpu.memory_space<vmem>>, %arg2: memref<1x32xf32, #tpu.memory_space<vmem>>, %arg3: memref<1x32xf32, #tpu.memory_space<vmem>>, %arg4: memref<16x32xf32, #tpu.memory_space<vmem>>) attributes {dimension_semantics = [#tpu.dimension_semantics<parallel>], iteration_bounds = array<i64: 1>, scalar_prefetch = 0 : i64, scratch_operands = 0 : i64, tpu.core_type = #tpu.core_type<tc>, window_params = [{transform_indices = @transform_0, window_bounds = array<i64: 16, 32>}, {pipeline_mode = #tpu.pipeline_mode<synchronous>, transform_indices = @transform_1, window_bounds = array<i64: 1, 32>}, {pipeline_mode = #tpu.pipeline_mode<synchronous>, transform_indices = @transform_2, window_bounds = array<i64: 1, 32>}, {transform_indices = @transform_3, window_bounds = array<i64: 16, 32>}]} {
    %c0 = arith.constant 0 : index
    %c0_0 = arith.constant 0 : index
    %0 = vector.load %arg1[%c0, %c0_0] : memref<16x32xf32, #tpu.memory_space<vmem>>, vector<16x32xf32>
    %cst = arith.constant dense<0.000000e+00> : vector<16xf32>
    %1 = vector.multi_reduction <add>, %0, %cst [1] : vector<16x32xf32> to vector<16xf32>
    %2 = vector.shape_cast %1 : vector<16xf32> to vector<16x1xf32>
    %cst_1 = arith.constant 3.200000e+01 : f32
    %3 = vector.broadcast %cst_1 : f32 to vector<16x1xf32>
    %4 = arith.divf %2, %3 : vector<16x1xf32>
    %5 = vector.broadcast %4 : vector<16x1xf32> to vector<16x32xf32>
    %6 = arith.subf %0, %5 : vector<16x32xf32>
    %7 = arith.mulf %6, %6 : vector<16x32xf32>
    %cst_2 = arith.constant dense<0.000000e+00> : vector<16xf32>
    %8 = vector.multi_reduction <add>, %7, %cst_2 [1] : vector<16x32xf32> to vector<16xf32>
    %9 = vector.shape_cast %8 : vector<16xf32> to vector<16x1xf32>
    %cst_3 = arith.constant 3.200000e+01 : f32
    %10 = vector.broadcast %cst_3 : f32 to vector<16x1xf32>
    %11 = arith.divf %9, %10 : vector<16x1xf32>
    %12 = vector.broadcast %4 : vector<16x1xf32> to vector<16x32xf32>
    %13 = arith.subf %0, %12 : vector<16x32xf32>
    %cst_4 = arith.constant 9.99999997E-7 : f32
    %14 = vector.broadcast %cst_4 : f32 to vector<16x1xf32>
    %15 = arith.addf %11, %14 : vector<16x1xf32>
    %16 = math.rsqrt %15 : vector<16x1xf32>
    %17 = vector.broadcast %16 : vector<16x1xf32> to vector<16x32xf32>
    %18 = arith.mulf %13, %17 : vector<16x32xf32>
    %c0_5 = arith.constant 0 : index
    %c0_6 = arith.constant 0 : index
    %19 = vector.load %arg2[%c0_5, %c0_6] : memref<1x32xf32, #tpu.memory_space<vmem>>, vector<1x32xf32>
    %20 = vector.broadcast %19 : vector<1x32xf32> to vector<16x32xf32>
    %21 = arith.mulf %18, %20 : vector<16x32xf32>
    %c0_7 = arith.constant 0 : index
    %c0_8 = arith.constant 0 : index
    %22 = vector.load %arg3[%c0_7, %c0_8] : memref<1x32xf32, #tpu.memory_space<vmem>>, vector<1x32xf32>
    %23 = vector.broadcast %22 : vector<1x32xf32> to vector<16x32xf32>
    %24 = arith.addf %21, %23 : vector<16x32xf32>
    %c0_9 = arith.constant 0 : index
    %c0_10 = arith.constant 0 : index
    %25 = vector.load %arg4[%c0_9, %c0_10] : memref<16x32xf32, #tpu.memory_space<vmem>>, vector<16x32xf32>
    tpu.vector_store %arg4[%c0_9, %c0_10], %24 {strides = array<i32>} : memref<16x32xf32, #tpu.memory_space<vmem>>, vector<16x32xf32>,
    return
  }
  func.func @transform_0(%arg0: i32) -> (i32, i32) {
    %c0_i32 = arith.constant 0 : i32
    %c0_i32_0 = arith.constant 0 : i32
    return %arg0, %c0_i32 : i32, i32
  }
  func.func @transform_1(%arg0: i32) -> (i32, i32) {
    %c0_i32 = arith.constant 0 : i32
    %c0_i32_0 = arith.constant 0 : i32
    %c0_i32_1 = arith.constant 0 : i32
    return %c0_i32, %c0_i32_0 : i32, i32
  }
  func.func @transform_2(%arg0: i32) -> (i32, i32) {
    %c0_i32 = arith.constant 0 : i32
    %c0_i32_0 = arith.constant 0 : i32
    %c0_i32_1 = arith.constant 0 : i32
    return %c0_i32, %c0_i32_0 : i32, i32
  }
  func.func @transform_3(%arg0: i32) -> (i32, i32) {
    %c0_i32 = arith.constant 0 : i32
    %c0_i32_0 = arith.constant 0 : i32
    return %arg0, %c0_i32 : i32, i32
  }
}

</mosaic_0001>

<llo_original>
// kernel: tpu_custom_call.1
$region0: #{tpu_custom_call.1}
  #allocation0 [shape = 'u32[]', space=smem, size = 0x4, offset = 0x4, fixed_abs, tag = 'smem constant byte address 0x4 - core index']
  #allocation1 [shape = 'u32[144,128]{1,0:T(1,128)}', space=vmem, size = 0x12000, scoped, tag = 'internal scratch']
  %s0 = inlined_call_operand.hbm [shape: f32[16,32], index: 0, kind: input, shape index: {}]
  %s1 = inlined_call_operand.vmem [shape: f32[1,32], index: 1, kind: input, shape index: {}]
  %s2 = inlined_call_operand.vmem [shape: f32[1,32], index: 2, kind: input, shape index: {}]
  %s3 = inlined_call_operand.hbm [shape: f32[16,32], index: 3, kind: output, shape index: {}]
  %s4 = sld [smem:[#allocation0]]
  $region26: #{tpu_custom_call.1} parent=0
    _
  %s6 = ssub.s32 1, %s4
  %s7 = scalar_select 0, %s6, %s4
  $region1: #{tpu_custom_call.1} parent=0
    #allocation2 [shape = 'u8[8192]{0}', space=vmem, size = 0x2000, scoped, tag = 'input window, operand 0, single buffered']
    #allocation3 [shape = 's32[1]{0}', space=sflag, size = 0x4, scoped, tag = 'scoped memory for tpu_custom_call.1']
    #allocation4 [shape = 's32[1]{0}', space=sflag, size = 0x4, scoped, tag = 'scoped memory for tpu_custom_call.1']
    #allocation5 [shape = 'u8[8192]{0}', space=vmem, size = 0x2000, scoped, tag = 'output window, operand 0, single buffered']
    %8 = vsyncpa [#allocation3], 0
    %9 = vsyncpa [#allocation4], 0
    // Predicated region
    $region2: #{tpu_custom_call.1} parent=1 // pred_check
      _
    $region3: #{tpu_custom_call.1} parent=1 // pred_check_branch
      %11 = sbr.rel (0) target = $region5
    $region4: #{tpu_custom_call.1} parent=1 // pred_region
      %s13 = ssub.s32 256, 256
      %14 = vsyncadd [#allocation3], %s13
      %s15 = sshll.u32 [#allocation2], 4
      %s16 = int_to_ptr.vmem [resolvable:$true] %s15
      %21 = dma.hbm_to_vmem [thread:$0]  %s0, 256, %s16, [#allocation3], 128, 128, 8
    $region5: #{tpu_custom_call.1} parent=1 // pred_fallthru
      _
    // Predicated region
    $region6: #{tpu_custom_call.1} parent=1 // pred_check
      _
    $region7: #{tpu_custom_call.1} parent=1 // pred_check_branch
      %23 = sbr.rel (0) target = $region9
    $region8: #{tpu_custom_call.1} parent=1 // pred_region
      _
    $region9: #{tpu_custom_call.1} parent=1 // pred_fallthru
      _
    // Predicated region
    $region10: #{tpu_custom_call.1} parent=1 // pred_check
      _
    $region11: #{tpu_custom_call.1} parent=1 // pred_check_branch
      %25 = sbr.rel (0) target = $region13
    $region12: #{tpu_custom_call.1} parent=1 // pred_region
      _
    $region13: #{tpu_custom_call.1} parent=1 // pred_fallthru
      _
    // Predicated region
    $region14: #{tpu_custom_call.1} parent=1 // pred_check
      _
    $region15: #{tpu_custom_call.1} parent=1 // pred_check_branch
      %27 = sbr.rel (0) target = $region17
    $region16: #{tpu_custom_call.1} parent=1 // pred_region
      %28 = dma.done [#allocation3], 256
    $region17: #{tpu_custom_call.1} parent=1 // pred_fallthru
      _
    %v29 = vld [vmem:[#allocation2] sm:$0xff]
    %v30 = vld [vmem:[#allocation2 + $0x8] sm:$0xff]
    %vm31 = vcmask 261120
    %v32 = vsel %vm31, %v29, 0.0
    %33 = vadd.xlane.f32.xlu0 %v32
    %v34 = vpop.xlane.xlu0 %33
    %v35 = vsel %vm31, %v30, 0.0
    %36 = vadd.xlane.f32.xlu0 %v35
    %v37 = vpop.xlane.xlu0 %36
    %v38 = vrcp.pop 32.0
    %v39 = vmul.f32 %v34, %v38
    %v40 = vmul.f32 %v37, %v38
    %v41 = vsub.f32 %v29, %v39
    %v42 = vsub.f32 %v30, %v40
    %v43 = vmul.f32 %v41, %v41
    %v44 = vmul.f32 %v42, %v42
    %v45 = vsel %vm31, %v43, 0.0
    %46 = vadd.xlane.f32.xlu0 %v45
    %v47 = vpop.xlane.xlu0 %46
    %v48 = vsel %vm31, %v44, 0.0
    %49 = vadd.xlane.f32.xlu0 %v48
    %v50 = vpop.xlane.xlu0 %49
    %v51 = vmul.f32 %v47, %v38
    %v52 = vmul.f32 %v50, %v38
    %v53 = vadd.f32 %v51, 1e-06
    %v54 = vadd.f32 %v52, 1e-06
    %v55 = vrsqrt.pop %v53
    %v56 = vrsqrt.pop %v54
    %v57 = vmul.f32 %v41, %v55
    %v58 = vmul.f32 %v42, %v56
    %v59 = vld [vmem:[%s1] sm:$0x1]
    %v61 = vlaneseq
    %v62 = vshrl.u32 %v61, 7
    %v63 = vsub.s32 0, %v62
    %v64 = vrot.slane %v59, %v63
    %v66 = vmul.f32 %v57, %v64
    %v67 = vmul.f32 %v58, %v64
    %v68 = vld [vmem:[%s2] sm:$0x1]
    %v70 = vlaneseq
    %v71 = vshrl.u32 %v70, 7
    %v72 = vsub.s32 0, %v71
    %v73 = vrot.slane %v68, %v72
    %v75 = vadd.f32 %v66, %v73
    %v76 = vadd.f32 %v67, %v73
    %77 = vst.msk [vmem:[#allocation5] sm:$0xff] %vm31, %v75
    %78 = vst.msk [vmem:[#allocation5 + $0x8] sm:$0xff] %vm31, %v76
    // Predicated region
    $region18: #{tpu_custom_call.1} parent=1 // pred_check
      _
    $region19: #{tpu_custom_call.1} parent=1 // pred_check_branch
      %80 = sbr.rel (0) target = $region21
    $region20: #{tpu_custom_call.1} parent=1 // pred_region
      %s82 = ssub.s32 256, 256
      %83 = vsyncadd [#allocation4], %s82
      %s84 = sshll.u32 [#allocation5], 4
      %s85 = int_to_ptr.vmem [resolvable:$true] %s84
      %90 = dma.vmem_to_hbm [thread:$0]  %s85, 256, %s3, [#allocation4], 128, 128, 8
    $region21: #{tpu_custom_call.1} parent=1 // pred_fallthru
      _
    // Predicated region
    $region22: #{tpu_custom_call.1} parent=1 // pred_check
      _
    $region23: #{tpu_custom_call.1} parent=1 // pred_check_branch
      %92 = sbr.rel (0) target = $region25
    $region24: #{tpu_custom_call.1} parent=1 // pred_region
      %93 = dma.done [#allocation4], 256
    $region25: #{tpu_custom_call.1} parent=1 // pred_fallthru
      _
    %94 = vsyncpa [#allocation3], 1
    %95 = vsyncpa [#allocation4], 1

</llo_original>
